<compile_context>
chip_gen: v5e
topology: v5e:2x2
jax: 0.10.0
libtpu: 0.0.40
codegen_flags: <defaults>
</compile_context>

<pallas_src>
import jax
import jax.numpy as jnp
from jax import lax
from jax.experimental import pallas as pl
from jax.experimental.pallas import tpu as pltpu

_LANE = 128
_SUBLANE = 8


def _round_up(x, m):
    return ((x + m - 1) // m) * m


def _design_wrapper_kernel(x_ref, w_ref, b_ref, o_ref, acc_ref):
    # x_ref: (TB, TD) bf16      w_ref: (M_pad, TD) bf16  (lane-dense feature axis)
    # b_ref: (1, M_pad) f32     o_ref: (TB, M_pad) f32   acc_ref: (TB, M_pad) f32
    k = pl.program_id(1)

    @pl.when(k == 0)
    def _():
        # Seed the accumulator with the bias row (broadcast over the batch tile).
        acc_ref[...] = jnp.broadcast_to(b_ref[...], acc_ref.shape)

    # (TB, TD) x (M_pad, TD) contracting over the feature axis -> (TB, M_pad).
    acc_ref[...] += lax.dot_general(
        x_ref[...], w_ref[...],
        dimension_numbers=(((1,), (1,)), ((), ())),
        preferred_element_type=jnp.float32)

    @pl.when(k == pl.num_programs(1) - 1)
    def _():
        o_ref[...] = acc_ref[...].astype(o_ref.dtype)


def design_wrapper_forward(x_nchw, w_stacked, b_stacked, *,
                           tb=256, td=512, force_pallas=False):
    """DesignWrapper forward: M per-model linear scorers fused into one matmul.

    x_nchw:    (B, C, H, W) input
    w_stacked: (M, D) stacked per-model weights, D = C*H*W (lane-dense layout)
    b_stacked: (M,)   stacked per-model biases
    returns    (B, M) float32  == torch.cat([model_m(X) for m in models], dim=-1)
    """
    B = x_nchw.shape[0]
    M, D = w_stacked.shape
    assert D == int(jnp.prod(jnp.array(x_nchw.shape[1:]))), "weight/feature mismatch"
    x_flat = x_nchw.reshape(B, D)  # same row-major flatten as torch .reshape(B, -1)

    # Tiny problems: per-step + launch overhead dominates a handwritten kernel;
    # let XLA fuse the dot into neighboring ops (unless caller forces Pallas).
    if (B * D * M < (1 << 18)) and not force_pallas:
        out = jnp.dot(x_flat.astype(jnp.float32), w_stacked.astype(jnp.float32).T)
        return out + b_stacked.astype(jnp.float32)[None, :]

    # ---- tiling / lane-dense padding ------------------------------------------
    m_pad = _round_up(M, _LANE)                      # lane-dense output columns
    tb = min(tb, _round_up(B, _SUBLANE))             # batch tile (sublane aligned)
    td = min(td, _round_up(D, _LANE))                # reduction tile (lane aligned)
    b_pad = _round_up(B, tb)
    d_pad = _round_up(D, td)

    # bf16 inputs halve HBM bytes; accumulation stays f32 on the MXU.
    x_p = jnp.pad(x_flat.astype(jnp.bfloat16),
                  ((0, b_pad - B), (0, d_pad - D)))
    w_p = jnp.pad(w_stacked.astype(jnp.bfloat16),
                  ((0, m_pad - M), (0, d_pad - D)))
    b_p = jnp.pad(b_stacked.astype(jnp.float32)[None, :],
                  ((0, 0), (0, m_pad - M)))

    grid = (b_pad // tb, d_pad // td)   # (batch tiles: parallel, D reduction: arbitrary)

    cost = pl.CostEstimate(
        flops=2 * b_pad * d_pad * m_pad,
        transcendentals=0,
        bytes_accessed=(b_pad * d_pad + m_pad * d_pad) * 2 + (b_pad + 1) * m_pad * 4,
    )

    out_padded = pl.pallas_call(
        _design_wrapper_kernel,
        out_shape=jax.ShapeDtypeStruct((b_pad, m_pad), jnp.float32),
        grid=grid,
        in_specs=[
            pl.BlockSpec((tb, td), lambda i, k: (i, k)),      # x streams per (i, k)
            pl.BlockSpec((m_pad, td), lambda i, k: (0, k)),   # W: only k-dependent
            pl.BlockSpec((1, m_pad), lambda i, k: (0, 0)),    # bias: resident
        ],
        out_specs=pl.BlockSpec((tb, m_pad), lambda i, k: (i, 0)),
        scratch_shapes=[pltpu.VMEM((tb, m_pad), jnp.float32)],
        compiler_params=pltpu.CompilerParams(
            dimension_semantics=("parallel", "arbitrary"),
            vmem_limit_bytes=32 * 1024 * 1024,
        ),
        cost_estimate=cost,
    )(x_p, w_p, b_p)

    return out_padded[:B, :M]


if __name__ == "__main__":
    # Small shapes consistent with the module: batch=2, channels=4, spatial=16,
    # M=3 wrapped sub-models, each producing (batch, 1).
    B, C, H, W = 2, 4, 16, 16
    D = C * H * W
    M = 3

    key = jax.random.PRNGKey(0)
    kx, kw, kb = jax.random.split(key, 3)

    x = jax.random.normal(kx, (B, C, H, W), dtype=jnp.float32)
    # Per-model parameters stacked lane-dense: w (M, D), b (M,).
    w_stacked = jax.random.normal(kw, (M, D), dtype=jnp.float32) * 0.02
    b_stacked = jax.random.normal(kb, (M,), dtype=jnp.float32) * 0.1

    out = design_wrapper_forward(x, w_stacked, b_stacked, force_pallas=True)
    out = jax.block_until_ready(out)

    # References (same semantics as torch.cat of per-model outputs).
    x_flat = x.reshape(B, D)
    ref_f32 = x_flat @ w_stacked.T + b_stacked[None, :]
    ref_bf16 = jnp.dot(x_flat.astype(jnp.bfloat16), w_stacked.astype(jnp.bfloat16).T,
                       preferred_element_type=jnp.float32) + b_stacked[None, :]

    assert out.shape == (B, M), out.shape
    # Tight vs. a bf16-input / f32-accumulation reference (what the kernel computes).
    assert jnp.allclose(out, ref_bf16, atol=2e-3, rtol=2e-3), (out, ref_bf16)
    # Loose vs. the full-f32 reference (bf16 input rounding only).
    assert jnp.allclose(out, ref_f32, atol=3e-2, rtol=3e-2), (out, ref_f32)

    print("KERNEL_OK")
</pallas_src>

<mosaic_0001>
module attributes {stable_mosaic.version = 11 : i64} {
  func.func @_design_wrapper_kernel(%arg0: i32, %arg1: i32, %arg2: memref<8x512xbf16, #tpu.memory_space<vmem>>, %arg3: memref<128x512xbf16, #tpu.memory_space<vmem>>, %arg4: memref<1x128xf32, #tpu.memory_space<vmem>>, %arg5: memref<8x128xf32, #tpu.memory_space<vmem>>, %arg6: memref<8x128xf32, #tpu.memory_space<vmem>>) attributes {dimension_semantics = [#tpu.dimension_semantics<parallel>, #tpu.dimension_semantics<arbitrary>], iteration_bounds = array<i64: 1, 2>, scalar_prefetch = 0 : i64, scratch_operands = 1 : i64, tpu.core_type = #tpu.core_type<tc>, window_params = [{transform_indices = @transform_0, window_bounds = array<i64: 8, 512>}, {transform_indices = @transform_1, window_bounds = array<i64: 128, 512>}, {pipeline_mode = #tpu.pipeline_mode<synchronous>, transform_indices = @transform_2, window_bounds = array<i64: 1, 128>}, {transform_indices = @transform_3, window_bounds = array<i64: 8, 128>}]} {
    %c0_i32 = arith.constant 0 : i32
    %0 = arith.cmpi eq, %arg1, %c0_i32 : i32
    %1 = arith.extui %0 : i1 to i32
    %c0_i32_0 = arith.constant 0 : i32
    %2 = arith.cmpi ne, %1, %c0_i32_0 : i32
    scf.if %2 {
      %c0_9 = arith.constant 0 : index
      %c0_10 = arith.constant 0 : index
      %12 = vector.load %arg4[%c0_9, %c0_10] : memref<1x128xf32, #tpu.memory_space<vmem>>, vector<1x128xf32>
      %13 = vector.shape_cast %12 : vector<1x128xf32> to vector<1x128xf32>
      %14 = vector.broadcast %13 : vector<1x128xf32> to vector<8x128xf32>
      %c0_11 = arith.constant 0 : index
      %c0_12 = arith.constant 0 : index
      %15 = vector.load %arg6[%c0_11, %c0_12] : memref<8x128xf32, #tpu.memory_space<vmem>>, vector<8x128xf32>
      tpu.vector_store %arg6[%c0_11, %c0_12], %14 {strides = array<i32>} : memref<8x128xf32, #tpu.memory_space<vmem>>, vector<8x128xf32>,
    } else {
    }
    %c0 = arith.constant 0 : index
    %c0_1 = arith.constant 0 : index
    %3 = vector.load %arg6[%c0, %c0_1] : memref<8x128xf32, #tpu.memory_space<vmem>>, vector<8x128xf32>
    %c0_2 = arith.constant 0 : index
    %c0_3 = arith.constant 0 : index
    %4 = vector.load %arg2[%c0_2, %c0_3] : memref<8x512xbf16, #tpu.memory_space<vmem>>, vector<8x512xbf16>
    %c0_4 = arith.constant 0 : index
    %c0_5 = arith.constant 0 : index
    %5 = vector.load %arg3[%c0_4, %c0_5] : memref<128x512xbf16, #tpu.memory_space<vmem>>, vector<128x512xbf16>
    %cst = arith.constant dense<0.000000e+00> : vector<8x128xf32>
    %6 = tpu.matmul %4, %5, %cst {dimension_numbers = #tpu.dot_dimension_numbers<[1], [1], [0], [0], [0, 0, 1, 0], [], []>} : vector<8x512xbf16>, vector<128x512xbf16>, vector<8x128xf32> -> vector<8x128xf32>
    %7 = arith.addf %3, %6 : vector<8x128xf32>
    %c0_6 = arith.constant 0 : index
    %c0_7 = arith.constant 0 : index
    %8 = vector.load %arg6[%c0_6, %c0_7] : memref<8x128xf32, #tpu.memory_space<vmem>>, vector<8x128xf32>
    tpu.vector_store %arg6[%c0_6, %c0_7], %7 {strides = array<i32>} : memref<8x128xf32, #tpu.memory_space<vmem>>, vector<8x128xf32>,
    %c1_i32 = arith.constant 1 : i32
    %9 = arith.cmpi eq, %arg1, %c1_i32 : i32
    %10 = arith.extui %9 : i1 to i32
    %c0_i32_8 = arith.constant 0 : i32
    %11 = arith.cmpi ne, %10, %c0_i32_8 : i32
    scf.if %11 {
      %c0_9 = arith.constant 0 : index
      %c0_10 = arith.constant 0 : index
      %12 = vector.load %arg6[%c0_9, %c0_10] : memref<8x128xf32, #tpu.memory_space<vmem>>, vector<8x128xf32>
      %c0_11 = arith.constant 0 : index
      %c0_12 = arith.constant 0 : index
      %13 = vector.load %arg5[%c0_11, %c0_12] : memref<8x128xf32, #tpu.memory_space<vmem>>, vector<8x128xf32>
      tpu.vector_store %arg5[%c0_11, %c0_12], %12 {strides = array<i32>} : memref<8x128xf32, #tpu.memory_space<vmem>>, vector<8x128xf32>,
    } else {
    }
    return
  }
  func.func @transform_0(%arg0: i32, %arg1: i32) -> (i32, i32) {
    %c0_i32 = arith.constant 0 : i32
    return %arg0, %arg1 : i32, i32
  }
  func.func @transform_1(%arg0: i32, %arg1: i32) -> (i32, i32) {
    %c0_i32 = arith.constant 0 : i32
    %c0_i32_0 = arith.constant 0 : i32
    return %c0_i32, %arg1 : i32, i32
  }
  func.func @transform_2(%arg0: i32, %arg1: i32) -> (i32, i32) {
    %c0_i32 = arith.constant 0 : i32
    %c0_i32_0 = arith.constant 0 : i32
    %c0_i32_1 = arith.constant 0 : i32
    return %c0_i32, %c0_i32_0 : i32, i32
  }
  func.func @transform_3(%arg0: i32, %arg1: i32) -> (i32, i32) {
    %c0_i32 = arith.constant 0 : i32
    %c0_i32_0 = arith.constant 0 : i32
    return %arg0, %c0_i32 : i32, i32
  }
}

</mosaic_0001>

<llo_original>
// kernel: tpu_custom_call.1
$region0: #{tpu_custom_call.1}
  #allocation0 [shape = 'u32[]', space=smem, size = 0x4, offset = 0x4, fixed_abs, tag = 'smem constant byte address 0x4 - core index']
  #allocation1 [shape = 'u32[72,128]{1,0:T(1,128)}', space=vmem, size = 0x9000, scoped, tag = 'internal scratch']
  #allocation2 [shape = 'f32[8,128]{1,0:T(8,128)}', space=vmem, size = 0x1000, scoped, tag = 'scratch operand']
  %s0 = inlined_call_operand.hbm [shape: bf16[8,1024], index: 0, kind: input, shape index: {}]
  %s1 = inlined_call_operand.hbm [shape: bf16[128,1024], index: 1, kind: input, shape index: {}]
  %s2 = inlined_call_operand.vmem [shape: f32[1,128], index: 2, kind: input, shape index: {}]
  %s3 = inlined_call_operand.hbm [shape: f32[8,128], index: 3, kind: output, shape index: {}]
  %s4 = sld [smem:[#allocation0]]
  $region61: #{tpu_custom_call.1} parent=0
    _
  %s6 = ssub.s32 1, %s4
  %s7 = scalar_select 0, %s6, %s4
  $region1: #{tpu_custom_call.1} parent=0
    #allocation3 [shape = 'u8[16384]{0}', space=vmem, size = 0x4000, scoped, tag = 'input window, operand 0']
    #allocation4 [shape = 's32[2]{0}', space=sflag, size = 0x8, scoped, tag = 'scoped memory for tpu_custom_call.1']
    #allocation5 [shape = 's32[2]{0}', space=sflag, size = 0x8, scoped, tag = 'scoped memory for tpu_custom_call.1']
    #allocation6 [shape = 'u8[262144]{0}', space=vmem, size = 0x40000, scoped, tag = 'input window, operand 1']
    #allocation7 [shape = 's32[2]{0}', space=sflag, size = 0x8, scoped, tag = 'scoped memory for tpu_custom_call.1']
    #allocation8 [shape = 'u8[4096]{0}', space=vmem, size = 0x1000, scoped, tag = 'output window, operand 0, single buffered']
    %8 = vsyncpa [#allocation4], 0
    %s9 = scalar_lea.sflag [#allocation4], 1
    %10 = vsyncpa %s9, 0
    %11 = vsyncpa [#allocation7], 0
    %s12 = scalar_lea.sflag [#allocation7], 1
    %13 = vsyncpa %s12, 0
    %14 = vsyncpa [#allocation5], 0
    loop: start=0, step=1, limit=4
    $region2: #{tpu_custom_call.1} parent=1 // loop_pre_header
      _
    $region3: #{tpu_custom_call.1} parent=1 // loop_header
      %s16 = sphi 0, %s20
      %p17 = scmp.ge.s32.totalorder %s16, 4
      %s23 = sphi 0, %s35
      %s24 = sphi 0, %s31
      %s25 = sphi 0, %s23
      %s26 = sphi 0, %s24
      %s27 = sphi 0, %s25
      %s28 = sphi 0, %s26
      %s40 = sphi 0, %s42
      %s43 = sphi 0, %s40
      %s44 = sphi 0, %s43
      %s60 = sphi 0, %s44
      %s66 = sphi 0, %s68
      %s69 = sphi 0, %s66
      %s70 = sphi 0, %s69
      %s86 = sphi 0, %s70
      %s90 = sphi 0, %s90
      %s92 = sphi 0, %s90
      %s93 = sphi 0, %s92
      %s107 = sphi 0, %s93
      %s113 = sphi 0, %s115
      %s116 = sphi 0, %s113
      %s117 = sphi 0, %s116
      %s133 = sphi 0, %s117
    $region4: #{tpu_custom_call.1} parent=1 // loop_header_branch
      %19 = sbr.rel (%p17) target = $region8
    $region5: #{tpu_custom_call.1} parent=1 // loop_body
      %s21 = ssub.s32 %s16, 1
      %s22 = ssub.s32 %s16, 2
      %s29 = sadd.s32 1, %s24
      %p30 = scmp.ge.s32.totalorder %s29, 2
      %s31 = scalar_select %p30, 0, %s29
      %s32 = sadd.s32 1, %s23
      %s33 = scalar_select %p30, %s32, %s23
      %p34 = scmp.ge.s32.totalorder %s33, 1
      %s35 = scalar_select %p34, 0, %s33
      %s36 = ssub.s32 %s23, %s35
      %s37 = ssub.s32 %s24, %s31
      %s38 = sor.u32 %s36, %s37
      %p39 = scmp.eq.s32.totalorder %s38, 0
      %s41 = sadd.s32 %s40, 1
      %s42 = scalar_select %p39, %s40, %s41
      %p45 = pneg %p39
      %p46 = scmp.eq.s32.totalorder %s16, 1
      %p47 = por %p45, %p46
      %p48 = scmp.ne.s32.totalorder %s40, %s43
      %p49 = scmp.eq.s32.totalorder %s16, 0
      %p50 = por %p48, %p49
      %p51 = scmp.ne.s32.totalorder %s40, %s43
      %p52 = scmp.eq.s32.totalorder %s21, 1
      %p53 = por %p51, %p52
      %p54 = scmp.ne.s32.totalorder %s43, %s44
      %p55 = scmp.eq.s32.totalorder %s21, 0
      %p56 = por %p54, %p55
      %p57 = scmp.ne.s32.totalorder %s43, %s44
      %p58 = scmp.eq.s32.totalorder %s22, 1
      %p59 = por %p57, %p58
      %p61 = scmp.ne.s32.totalorder %s44, %s60
      %p62 = scmp.eq.s32.totalorder %s22, 0
      %p63 = por %p61, %p62
      %s64 = ssub.s32 %s24, %s31
      %p65 = scmp.eq.s32.totalorder %s64, 0
      %s67 = sadd.s32 %s66, 1
      %s68 = scalar_select %p65, %s66, %s67
      %p71 = pneg %p65
      %p72 = scmp.eq.s32.totalorder %s16, 1
      %p73 = por %p71, %p72
      %p74 = scmp.ne.s32.totalorder %s66, %s69
      %p75 = scmp.eq.s32.totalorder %s16, 0
      %p76 = por %p74, %p75
      %p77 = scmp.ne.s32.totalorder %s66, %s69
      %p78 = scmp.eq.s32.totalorder %s21, 1
      %p79 = por %p77, %p78
      %p80 = scmp.ne.s32.totalorder %s69, %s70
      %p81 = scmp.eq.s32.totalorder %s21, 0
      %p82 = por %p80, %p81
      %p83 = scmp.ne.s32.totalorder %s69, %s70
      %p84 = scmp.eq.s32.totalorder %s22, 1
      %p85 = por %p83, %p84
      %p87 = scmp.ne.s32.totalorder %s70, %s86
      %p88 = scmp.eq.s32.totalorder %s22, 0
      %p89 = por %p87, %p88
      %s91 = sadd.s32 %s90, 1
      %p94 = scmp.eq.s32.totalorder %s16, 1
      %p95 = scmp.ne.s32.totalorder %s90, %s92
      %p96 = scmp.eq.s32.totalorder %s16, 0
      %p97 = por %p95, %p96
      %p98 = scmp.ne.s32.totalorder %s90, %s92
      %p99 = scmp.eq.s32.totalorder %s21, 1
      %p100 = por %p98, %p99
      %p101 = scmp.ne.s32.totalorder %s92, %s93
      %p102 = scmp.eq.s32.totalorder %s21, 0
      %p103 = por %p101, %p102
      %p104 = scmp.ne.s32.totalorder %s92, %s93
      %p105 = scmp.eq.s32.totalorder %s22, 1
      %p106 = por %p104, %p105
      %p108 = scmp.ne.s32.totalorder %s93, %s107
      %p109 = scmp.eq.s32.totalorder %s22, 0
      %p110 = por %p108, %p109
      %s111 = ssub.s32 %s23, %s35
      %p112 = scmp.eq.s32.totalorder %s111, 0
      %s114 = sadd.s32 %s113, 1
      %s115 = scalar_select %p112, %s113, %s114
      %p118 = pneg %p112
      %p119 = scmp.eq.s32.totalorder %s16, 1
      %p120 = por %p118, %p119
      %p121 = scmp.ne.s32.totalorder %s113, %s116
      %p122 = scmp.eq.s32.totalorder %s16, 0
      %p123 = por %p121, %p122
      %p124 = scmp.ne.s32.totalorder %s113, %s116
      %p125 = scmp.eq.s32.totalorder %s21, 1
      %p126 = por %p124, %p125
      %p127 = scmp.ne.s32.totalorder %s116, %s117
      %p128 = scmp.eq.s32.totalorder %s21, 0
      %p129 = por %p127, %p128
      %p130 = scmp.ne.s32.totalorder %s116, %s117
      %p131 = scmp.eq.s32.totalorder %s22, 1
      %p132 = por %p130, %p131
      %p134 = scmp.ne.s32.totalorder %s117, %s133
      %p135 = scmp.eq.s32.totalorder %s22, 0
      %p136 = por %p134, %p135
      %p137 = scmp.le.s32.totalorder 1, %s16
      %p138 = scmp.lt.s32.totalorder %s16, 3
      %p139 = pnand %p137, %p138
      %p140 = pneg %p139
      // Predicated region
      $region9: #{tpu_custom_call.1} parent=5 // pred_check
        _
      $region10: #{tpu_custom_call.1} parent=5 // pred_check_branch
        %142 = sbr.rel (%p139) target = $region12
      $region11: #{tpu_custom_call.1} parent=5 // pred_region
        %s143 = ssub.s32 %s16, 1
        // Predicated region
        $region13: #{tpu_custom_call.1} parent=11 // pred_check
          %p144 = pneg %p103
        $region14: #{tpu_custom_call.1} parent=11 // pred_check_branch
          %146 = sbr.rel (%p144) target = $region16
        $region15: #{tpu_custom_call.1} parent=11 // pred_region
          _
        $region16: #{tpu_custom_call.1} parent=11 // pred_fallthru
          _
      $region12: #{tpu_custom_call.1} parent=5 // pred_fallthru
        _
      %p147 = scmp.lt.s32.totalorder %s16, 2
      // Predicated region
      $region17: #{tpu_custom_call.1} parent=5 // pred_check
        %p148 = pneg %p147
      $region18: #{tpu_custom_call.1} parent=5 // pred_check_branch
        %150 = sbr.rel (%p148) target = $region20
      $region19: #{tpu_custom_call.1} parent=5 // pred_region
        // Predicated region
        $region21: #{tpu_custom_call.1} parent=19 // pred_check
          %p151 = pneg %p50
        $region22: #{tpu_custom_call.1} parent=19 // pred_check_branch
          %153 = sbr.rel (%p151) target = $region24
        $region23: #{tpu_custom_call.1} parent=19 // pred_region
          %s154 = sand.u32 %s40, 1
          %s155 = scalar_lea.sflag [#allocation4], %s154
          %s156 = sand.u32 %s40, 1
          %s157 = smul.addr %s156, 16
          %s158 = scalar_lea.vmem [#allocation3], %s157
          %s159 = smul.u32 4, %s24
          %161 = vsyncadd %s155, 0
          %s162 = smul.addr %s23, 8
          %s163 = sadd.s32 %s159, %s162
          %s164 = smul.addr %s163, 4
          %s165 = scalar_lea.hbm %s0, %s164
          %s167 = sshll.u32 %s165, 4
          %s168 = int_to_ptr.hbm [resolvable:$true] %s167
          %s169 = sshll.u32 %s158, 4
          %s170 = int_to_ptr.vmem [resolvable:$true] %s169
          %172 = dma.hbm_to_vmem [thread:$0]  %s168, 256, %s170, %s155
        $region24: #{tpu_custom_call.1} parent=19 // pred_fallthru
          _
        // Predicated region
        $region25: #{tpu_custom_call.1} parent=19 // pred_check
          %p173 = pneg %p76
        $region26: #{tpu_custom_call.1} parent=19 // pred_check_branch
          %175 = sbr.rel (%p173) target = $region28
        $region27: #{tpu_custom_call.1} parent=19 // pred_region
          %s176 = sand.u32 %s66, 1
          %s177 = scalar_lea.sflag [#allocation7], %s176
          %s178 = sand.u32 %s66, 1
          %s179 = smul.addr %s178, 256
          %s180 = scalar_lea.vmem [#allocation6], %s179
          %s181 = smul.u32 4, %s24
          %183 = vsyncadd %s177, 0
          %s184 = smul.addr %s181, 4
          %s185 = scalar_lea.hbm %s1, %s184
          %s186 = sshll.u32 %s185, 4
          %s187 = int_to_ptr.hbm [resolvable:$true] %s186
          %s188 = sshll.u32 %s180, 4
          %s189 = int_to_ptr.vmem [resolvable:$true] %s188
          %194 = dma.hbm_to_vmem [thread:$0]  %s187, 4096, %s189, %s177, 512, 256, 16
        $region28: #{tpu_custom_call.1} parent=19 // pred_fallthru
          _
      $region20: #{tpu_custom_call.1} parent=5 // pred_fallthru
        _
      %p195 = scmp.le.s32.totalorder 1, %s16
      %p196 = scmp.lt.s32.totalorder %s16, 3
      %p197 = pnand %p195, %p196
      %p198 = pneg %p197
      // Predicated region
      $region29: #{tpu_custom_call.1} parent=5 // pred_check
        _
      $region30: #{tpu_custom_call.1} parent=5 // pred_check_branch
        %200 = sbr.rel (%p197) target = $region32
      $region31: #{tpu_custom_call.1} parent=5 // pred_region
        %s201 = ssub.s32 %s16, 1
        %s202 = sand.u32 %s43, 1
        %s203 = scalar_lea.sflag [#allocation4], %s202
        %s204 = sand.u32 %s43, 1
        %s205 = smul.addr %s204, 16
        %s206 = scalar_lea.vmem [#allocation3], %s205
        // Predicated region
        $region33: #{tpu_custom_call.1} parent=31 // pred_check
          %p207 = pneg %p56
        $region34: #{tpu_custom_call.1} parent=31 // pred_check_branch
          %209 = sbr.rel (%p207) target = $region36
        $region35: #{tpu_custom_call.1} parent=31 // pred_region
          %211 = dma.done %s203, 256
        $region36: #{tpu_custom_call.1} parent=31 // pred_fallthru
          _
        %s212 = sand.u32 %s69, 1
        %s213 = scalar_lea.sflag [#allocation7], %s212
        %s214 = sand.u32 %s69, 1
        %s215 = smul.addr %s214, 256
        %s216 = scalar_lea.vmem [#allocation6], %s215
        // Predicated region
        $region37: #{tpu_custom_call.1} parent=31 // pred_check
          %p217 = pneg %p82
        $region38: #{tpu_custom_call.1} parent=31 // pred_check_branch
          %219 = sbr.rel (%p217) target = $region40
        $region39: #{tpu_custom_call.1} parent=31 // pred_region
          %221 = dma.done %s213, 4096
        $region40: #{tpu_custom_call.1} parent=31 // pred_fallthru
          _
        %s222 = sand.u32 %s43, 1
        %s223 = scalar_lea.sflag [#allocation4], %s222
        %s224 = sand.u32 %s43, 1
        %s225 = smul.addr %s224, 16
        %s226 = scalar_lea.vmem [#allocation3], %s225
        %p227 = pneg %p56
        %p228 = pneg %p53
        %s229 = sand.u32 %s69, 1
        %s230 = scalar_lea.sflag [#allocation7], %s229
        %s231 = sand.u32 %s69, 1
        %s232 = smul.addr %s231, 256
        %s233 = scalar_lea.vmem [#allocation6], %s232
        %p234 = pneg %p82
        %p235 = pneg %p79
        %p236 = pneg %p103
        %p237 = pneg %p100
        %p238 = pneg %p129
        %p239 = pneg %p126
        %s240 = smul.u32 4, %s26
        %s241 = smul.u32 4, %s26
        %p242 = scmp.eq.s32.totalorder %s26, 0
        // Predicated region
        $region41: #{tpu_custom_call.1} parent=31 // pred_check
          %p243 = pneg %p242
        $region42: #{tpu_custom_call.1} parent=31 // pred_check_branch
          %245 = sbr.rel (%p243) target = $region44
        $region43: #{tpu_custom_call.1} parent=31 // pred_region
          %v246 = vld [vmem:[%s2] sm:$0x1]
          %v248 = vperm.slane %v246, 0
          %250 = vst [vmem:[#allocation2] sm:$0xff] %v248
        $region44: #{tpu_custom_call.1} parent=31 // pred_fallthru
          _
        %v251 = vld [vmem:[#allocation2] sm:$0xff]
        %v252 = vld [vmem:[%s206] sm:$0xff]
        %v253 = vld [vmem:[%s206 + $0x8] sm:$0xff]
        %v254 = vld [vmem:[%s216] sm:$0xff]
        %v255 = vld [vmem:[%s216 + $0x8] sm:$0xff]
        %v256 = vld [vmem:[%s216 + $0x10] sm:$0xff]
        %v257 = vld [vmem:[%s216 + $0x18] sm:$0xff]
        %v258 = vld [vmem:[%s216 + $0x20] sm:$0xff]
        %v259 = vld [vmem:[%s216 + $0x28] sm:$0xff]
        %v260 = vld [vmem:[%s216 + $0x30] sm:$0xff]
        %v261 = vld [vmem:[%s216 + $0x38] sm:$0xff]
        %v262 = vld [vmem:[%s216 + $0x40] sm:$0xff]
        %v263 = vld [vmem:[%s216 + $0x48] sm:$0xff]
        %v264 = vld [vmem:[%s216 + $0x50] sm:$0xff]
        %v265 = vld [vmem:[%s216 + $0x58] sm:$0xff]
        %v266 = vld [vmem:[%s216 + $0x60] sm:$0xff]
        %v267 = vld [vmem:[%s216 + $0x68] sm:$0xff]
        %v268 = vld [vmem:[%s216 + $0x70] sm:$0xff]
        %v269 = vld [vmem:[%s216 + $0x78] sm:$0xff]
        %v270 = vld [vmem:[%s216 + $0x80] sm:$0xff]
        %v271 = vld [vmem:[%s216 + $0x88] sm:$0xff]
        %v272 = vld [vmem:[%s216 + $0x90] sm:$0xff]
        %v273 = vld [vmem:[%s216 + $0x98] sm:$0xff]
        %v274 = vld [vmem:[%s216 + $0xa0] sm:$0xff]
        %v275 = vld [vmem:[%s216 + $0xa8] sm:$0xff]
        %v276 = vld [vmem:[%s216 + $0xb0] sm:$0xff]
        %v277 = vld [vmem:[%s216 + $0xb8] sm:$0xff]
        %v278 = vld [vmem:[%s216 + $0xc0] sm:$0xff]
        %v279 = vld [vmem:[%s216 + $0xc8] sm:$0xff]
        %v280 = vld [vmem:[%s216 + $0xd0] sm:$0xff]
        %v281 = vld [vmem:[%s216 + $0xd8] sm:$0xff]
        %v282 = vld [vmem:[%s216 + $0xe0] sm:$0xff]
        %v283 = vld [vmem:[%s216 + $0xe8] sm:$0xff]
        %v284 = vld [vmem:[%s216 + $0xf0] sm:$0xff]
        %v285 = vld [vmem:[%s216 + $0xf8] sm:$0xff]
        %v288 = vunpack.c.l.b16 %v252
        %v289 = vunpack.c.h.b16 %v252
        %v290 = vunpack.c.l.b16 %v253
        %v291 = vunpack.c.h.b16 %v253
        %v292 = vpack.c.b16 %v288, %v288
        %v293 = vpack.c.b16 %v289, %v289
        %v294 = vpack.c.b16 %v290, %v290
        %v295 = vpack.c.b16 %v291, %v291
        %v332 = vunpack.c.l.b16 %v254
        %v333 = vunpack.c.h.b16 %v254
        %v334 = vunpack.c.l.b16 %v255
        %v335 = vunpack.c.h.b16 %v255
        %v336 = vunpack.c.l.b16 %v256
        %v337 = vunpack.c.h.b16 %v256
        %v338 = vunpack.c.l.b16 %v257
        %v339 = vunpack.c.h.b16 %v257
        %v340 = vunpack.c.l.b16 %v258
        %v341 = vunpack.c.h.b16 %v258
        %v342 = vunpack.c.l.b16 %v259
        %v343 = vunpack.c.h.b16 %v259
        %v344 = vunpack.c.l.b16 %v260
        %v345 = vunpack.c.h.b16 %v260
        %v346 = vunpack.c.l.b16 %v261
        %v347 = vunpack.c.h.b16 %v261
        %v348 = vunpack.c.l.b16 %v262
        %v349 = vunpack.c.h.b16 %v262
        %v350 = vunpack.c.l.b16 %v263
        %v351 = vunpack.c.h.b16 %v263
        %v352 = vunpack.c.l.b16 %v264
        %v353 = vunpack.c.h.b16 %v264
        %v354 = vunpack.c.l.b16 %v265
        %v355 = vunpack.c.h.b16 %v265
        %v356 = vunpack.c.l.b16 %v266
        %v357 = vunpack.c.h.b16 %v266
        %v358 = vunpack.c.l.b16 %v267
        %v359 = vunpack.c.h.b16 %v267
        %v360 = vunpack.c.l.b16 %v268
        %v361 = vunpack.c.h.b16 %v268
        %v362 = vunpack.c.l.b16 %v269
        %v363 = vunpack.c.h.b16 %v269
        %v364 = vunpack.c.l.b16 %v270
        %v365 = vunpack.c.h.b16 %v270
        %v366 = vunpack.c.l.b16 %v271
        %v367 = vunpack.c.h.b16 %v271
        %v368 = vunpack.c.l.b16 %v272
        %v369 = vunpack.c.h.b16 %v272
        %v370 = vunpack.c.l.b16 %v273
        %v371 = vunpack.c.h.b16 %v273
        %v372 = vunpack.c.l.b16 %v274
        %v373 = vunpack.c.h.b16 %v274
        %v374 = vunpack.c.l.b16 %v275
        %v375 = vunpack.c.h.b16 %v275
        %v376 = vunpack.c.l.b16 %v276
        %v377 = vunpack.c.h.b16 %v276
        %v378 = vunpack.c.l.b16 %v277
        %v379 = vunpack.c.h.b16 %v277
        %v380 = vunpack.c.l.b16 %v278
        %v381 = vunpack.c.h.b16 %v278
        %v382 = vunpack.c.l.b16 %v279
        %v383 = vunpack.c.h.b16 %v279
        %v384 = vunpack.c.l.b16 %v280
        %v385 = vunpack.c.h.b16 %v280
        %v386 = vunpack.c.l.b16 %v281
        %v387 = vunpack.c.h.b16 %v281
        %v388 = vunpack.c.l.b16 %v282
        %v389 = vunpack.c.h.b16 %v282
        %v390 = vunpack.c.l.b16 %v283
        %v391 = vunpack.c.h.b16 %v283
        %v392 = vunpack.c.l.b16 %v284
        %v393 = vunpack.c.h.b16 %v284
        %v394 = vunpack.c.l.b16 %v285
        %v395 = vunpack.c.h.b16 %v285
        %v396 = vpack.c.b16 %v336, %v332
        %v397 = vpack.c.b16 %v337, %v333
        %v398 = vpack.c.b16 %v338, %v334
        %v399 = vpack.c.b16 %v339, %v335
        %v400 = vpack.c.b16 %v344, %v340
        %v401 = vpack.c.b16 %v345, %v341
        %v402 = vpack.c.b16 %v346, %v342
        %v403 = vpack.c.b16 %v347, %v343
        %v404 = vpack.c.b16 %v352, %v348
        %v405 = vpack.c.b16 %v353, %v349
        %v406 = vpack.c.b16 %v354, %v350
        %v407 = vpack.c.b16 %v355, %v351
        %v408 = vpack.c.b16 %v360, %v356
        %v409 = vpack.c.b16 %v361, %v357
        %v410 = vpack.c.b16 %v362, %v358
        %v411 = vpack.c.b16 %v363, %v359
        %v412 = vpack.c.b16 %v368, %v364
        %v413 = vpack.c.b16 %v369, %v365
        %v414 = vpack.c.b16 %v370, %v366
        %v415 = vpack.c.b16 %v371, %v367
        %v416 = vpack.c.b16 %v376, %v372
        %v417 = vpack.c.b16 %v377, %v373
        %v418 = vpack.c.b16 %v378, %v374
        %v419 = vpack.c.b16 %v379, %v375
        %v420 = vpack.c.b16 %v384, %v380
        %v421 = vpack.c.b16 %v385, %v381
        %v422 = vpack.c.b16 %v386, %v382
        %v423 = vpack.c.b16 %v387, %v383
        %v424 = vpack.c.b16 %v392, %v388
        %v425 = vpack.c.b16 %v393, %v389
        %v426 = vpack.c.b16 %v394, %v390
        %v427 = vpack.c.b16 %v395, %v391
        %460 = vmatpush.bf16.xpose.msra.mxu0 %v424
        %461 = vmatpush.bf16.xpose.msra.mxu0 %v420
        %462 = vmatpush.bf16.xpose.msra.mxu0 %v416
        %463 = vmatpush.bf16.xpose.msra.mxu0 %v412
        %464 = vmatpush.bf16.xpose.msra.mxu0 %v408
        %465 = vmatpush.bf16.xpose.msra.mxu0 %v404
        %466 = vmatpush.bf16.xpose.msra.mxu0 %v400
        %467 = vmatpush.bf16.xpose.msra.mxu0 %v396
        %468 = vmatmul.bf16.gmra.mxu0 %v292
        %v469 = vpop.f32.mrf.mxu0
        %v470 = vadd.f32 0.0, %v469
        %v471 = vpop.f32.mrf.mxu0
        %472 = vdwg.mxu0
        %473 = vmatpush.bf16.xpose.msra.mxu0 %v425
        %474 = vmatpush.bf16.xpose.msra.mxu0 %v421
        %475 = vmatpush.bf16.xpose.msra.mxu0 %v417
        %476 = vmatpush.bf16.xpose.msra.mxu0 %v413
        %477 = vmatpush.bf16.xpose.msra.mxu0 %v409
        %478 = vmatpush.bf16.xpose.msra.mxu0 %v405
        %479 = vmatpush.bf16.xpose.msra.mxu0 %v401
        %480 = vmatpush.bf16.xpose.msra.mxu0 %v397
        %481 = vmatmul.bf16.gmra.mxu0 %v293
        %v482 = vpop.f32.mrf.mxu0
        %v483 = vadd.f32 %v470, %v482
        %v484 = vpop.f32.mrf.mxu0
        %485 = vdwg.mxu0
        %486 = vmatpush.bf16.xpose.msra.mxu0 %v426
        %487 = vmatpush.bf16.xpose.msra.mxu0 %v422
        %488 = vmatpush.bf16.xpose.msra.mxu0 %v418
        %489 = vmatpush.bf16.xpose.msra.mxu0 %v414
        %490 = vmatpush.bf16.xpose.msra.mxu0 %v410
        %491 = vmatpush.bf16.xpose.msra.mxu0 %v406
        %492 = vmatpush.bf16.xpose.msra.mxu0 %v402
        %493 = vmatpush.bf16.xpose.msra.mxu0 %v398
        %494 = vmatmul.bf16.gmra.mxu0 %v294
        %v495 = vpop.f32.mrf.mxu0
        %v496 = vadd.f32 %v483, %v495
        %v497 = vpop.f32.mrf.mxu0
        %498 = vdwg.mxu0
        %499 = vmatpush.bf16.xpose.msra.mxu0 %v427
        %500 = vmatpush.bf16.xpose.msra.mxu0 %v423
        %501 = vmatpush.bf16.xpose.msra.mxu0 %v419
        %502 = vmatpush.bf16.xpose.msra.mxu0 %v415
        %503 = vmatpush.bf16.xpose.msra.mxu0 %v411
        %504 = vmatpush.bf16.xpose.msra.mxu0 %v407
        %505 = vmatpush.bf16.xpose.msra.mxu0 %v403
        %506 = vmatpush.bf16.xpose.msra.mxu0 %v399
        %507 = vmatmul.bf16.gmra.mxu0 %v295
        %v508 = vpop.f32.mrf.mxu0
        %v509 = vadd.f32 %v496, %v508
        %v510 = vpop.f32.mrf.mxu0
        %511 = vdwg.mxu0
        %v512 = vadd.f32 %v251, %v509
        %513 = vst [vmem:[#allocation2] sm:$0xff] %v512
        %p514 = scmp.eq.s32.totalorder %s26, 1
        // Predicated region
        $region45: #{tpu_custom_call.1} parent=31 // pred_check
          %p515 = pneg %p514
        $region46: #{tpu_custom_call.1} parent=31 // pred_check_branch
          %517 = sbr.rel (%p515) target = $region48
        $region47: #{tpu_custom_call.1} parent=31 // pred_region
          %v518 = vld [vmem:[#allocation2] sm:$0xff]
          %519 = vst [vmem:[#allocation8] sm:$0xff] %v518
        $region48: #{tpu_custom_call.1} parent=31 // pred_fallthru
          _
        // Predicated region
        $region49: #{tpu_custom_call.1} parent=31 // pred_check
          %p520 = pneg %p126
        $region50: #{tpu_custom_call.1} parent=31 // pred_check_branch
          %522 = sbr.rel (%p520) target = $region52
        $region51: #{tpu_custom_call.1} parent=31 // pred_region
          %524 = vsyncadd [#allocation5], 0
          %s525 = smul.addr %s25, 8
          %s526 = scalar_lea.hbm %s3, %s525
          %s528 = sshll.u32 [#allocation8], 4
          %s529 = int_to_ptr.vmem [resolvable:$true] %s528
          %s530 = sshll.u32 %s526, 4
          %s531 = int_to_ptr.hbm [resolvable:$true] %s530
          %533 = dma.vmem_to_hbm [thread:$0]  %s529, 128, %s531, [#allocation5]
        $region52: #{tpu_custom_call.1} parent=31 // pred_fallthru
          _
        // Predicated region
        $region53: #{tpu_custom_call.1} parent=31 // pred_check
          %p534 = pneg %p126
        $region54: #{tpu_custom_call.1} parent=31 // pred_check_branch
          %536 = sbr.rel (%p534) target = $region56
        $region55: #{tpu_custom_call.1} parent=31 // pred_region
          %538 = dma.done [#allocation5], 128
        $region56: #{tpu_custom_call.1} parent=31 // pred_fallthru
          _
      $region32: #{tpu_custom_call.1} parent=5 // pred_fallthru
        _
      %p539 = scmp.le.s32.totalorder 2, %s16
      // Predicated region
      $region57: #{tpu_custom_call.1} parent=5 // pred_check
        %p540 = pneg %p539
      $region58: #{tpu_custom_call.1} parent=5 // pred_check_branch
        %542 = sbr.rel (%p540) target = $region60
      $region59: #{tpu_custom_call.1} parent=5 // pred_region
        %s543 = ssub.s32 %s16, 2
      $region60: #{tpu_custom_call.1} parent=5 // pred_fallthru
        _
    $region6: #{tpu_custom_call.1} parent=1 // loop_footer
      %s20 = sadd.s32 1, %s16
    $region7: #{tpu_custom_call.1} parent=1 // loop_footer_branch
      %15 = sbr.rel target = $region3
    $region8: #{tpu_custom_call.1} parent=1 // loop_exit
      _
    %544 = vsyncpa [#allocation4], 1
    %s545 = scalar_lea.sflag [#allocation4], 1
    %546 = vsyncpa %s545, 1
    %547 = vsyncpa [#allocation7], 1
    %s548 = scalar_lea.sflag [#allocation7], 1
    %549 = vsyncpa %s548, 1
    %550 = vsyncpa [#allocation5], 1
    %s551 = scalar_lea.sflag [#allocation5], 1
    %552 = vsyncpa %s551, 1

</llo_original>
